<compile_context>
chip_gen: v7x
topology: tpu7x:2x2x1
jax: 0.10.0
libtpu: 0.0.40
codegen_flags: <defaults>
</compile_context>

<pallas_src>
import functools
import math

import jax
import jax.numpy as jnp
from jax.experimental import pallas as pl
from jax.experimental.pallas import tpu as pltpu


def _round_up(n: int, m: int) -> int:
    return -(-n // m) * m


def _step_embedding_kernel(x_ref, div_ref, out_ref, *, half: int, g: int):
    # x_ref:   (tile, g)             float32  (g batch rows packed per sublane row)
    # div_ref: (1, half)             float32  (resident across the whole grid)
    # out_ref: (tile, g * 2 * half)  out dtype (lane-dense when g*2*half >= 128)
    div_row = div_ref[...]                                   # (1, half)
    if g == 1 and half % 128 == 0:
        # 128-aligned sliced stores: already unmasked, skips the 2x-wide concat temp.
        arg = x_ref[...] * div_row                           # (tile, half) VPU broadcast
        out_ref[:, :half] = jnp.sin(arg).astype(out_ref.dtype)
        out_ref[:, half:] = jnp.cos(arg).astype(out_ref.dtype)
    else:
        pieces = []
        for col in range(g):                                 # static unroll, g small
            arg = x_ref[:, col : col + 1] * div_row          # (tile, half) VPU broadcast
            pieces.append(jnp.sin(arg))                      # EUP
            pieces.append(jnp.cos(arg))                      # EUP
        emb = jnp.concatenate(pieces, axis=-1)               # lane concat (XLU)
        out_ref[...] = emb.astype(out_ref.dtype)             # single full-block store


def make_div_term(embedding_dim: int) -> jnp.ndarray:
    assert embedding_dim % 2 == 0
    half_dim = embedding_dim // 2
    assert half_dim > 1, "embedding_dim must be >= 4 (half_dim - 1 in denominator)"
    div = math.log(10000.0) / (half_dim - 1)
    return jnp.exp(jnp.arange(half_dim, dtype=jnp.float32) * -div)  # (half_dim,)


def step_embedding(
    x: jnp.ndarray,
    div_term: jnp.ndarray,
    *,
    out_dtype=jnp.float32,
    max_rows_per_block: int = 8192,
) -> jnp.ndarray:
    """x: (B,) float, div_term: (half,) float -> (B, 2*half) out_dtype."""
    B = x.shape[0]
    half = div_term.shape[0]
    emb_dim = 2 * half
    out_itemsize = jnp.dtype(out_dtype).itemsize

    # Pack g batch rows per block row so the output's last dim is >= 128 lanes
    # (unmasked stores) even for small embedding dims.  The wrapper-side
    # reshapes below are free row-major (bitcast) reshapes.
    if emb_dim < 128 and 128 % emb_dim == 0 and B % (128 // emb_dim) == 0:
        g = 128 // emb_dim
    else:
        g = 1
    P = B // g                     # number of block rows of work
    row_width = g * emb_dim        # output columns per block row

    x2d = x.astype(jnp.float32).reshape(P, g)
    div2d = div_term.astype(jnp.float32).reshape(1, half)

    if P <= 8:
        tile = P                   # single (possibly sub-8-row) block == full dim
    else:
        # Cap so the double-buffered out block stays ~8 MiB (v7x: 32 MiB scoped
        # VMEM default, shared with the lane-padded x buffers).
        bytes_per_row = max(row_width, 128) * out_itemsize
        vmem_cap = max(8, ((8 * 1024 * 1024) // bytes_per_row) // 8 * 8)
        user_cap = max(8, (max_rows_per_block // g) // 8 * 8)
        # At least 2 grid steps so ("parallel",) shards across both v7x cores.
        half_split = _round_up(pl.cdiv(P, 2), 8)
        tile = min(vmem_cap, user_cap, half_split)
    grid_b = pl.cdiv(P, tile)      # partial trailing block handled by Pallas

    cost = pl.CostEstimate(
        flops=B * half,                                  # broadcast multiplies
        transcendentals=B * emb_dim,                     # sin + cos
        bytes_accessed=B * 4 + half * 4 + B * emb_dim * out_itemsize,
    )

    out = pl.pallas_call(
        functools.partial(_step_embedding_kernel, half=half, g=g),
        out_shape=jax.ShapeDtypeStruct((P, row_width), out_dtype),
        grid_spec=pltpu.PrefetchScalarGridSpec(
            num_scalar_prefetch=0,
            grid=(grid_b,),
            in_specs=[
                pl.BlockSpec((tile, g), lambda i: (i, 0)),      # packed x rows
                pl.BlockSpec((1, half), lambda i: (0, 0)),      # div_term, resident
            ],
            out_specs=pl.BlockSpec((tile, row_width), lambda i: (i, 0)),
        ),
        compiler_params=pltpu.CompilerParams(
            dimension_semantics=("parallel",),           # megacore split on v7x
        ),
        cost_estimate=cost,
    )(x2d, div2d)

    # Free row-major reshape back to the module's (B, emb_dim) layout.
    return out.reshape(B, emb_dim)


def step_embedding_ref(x: jnp.ndarray, div_term: jnp.ndarray) -> jnp.ndarray:
    arg = x[:, None].astype(jnp.float32) * div_term[None, :].astype(jnp.float32)
    return jnp.concatenate([jnp.sin(arg), jnp.cos(arg)], axis=1)


if __name__ == "__main__":
    embedding_dim = 32   # -> half_dim = 16
    batch = 8

    key = jax.random.PRNGKey(0)
    # float timesteps in [0, 1000)
    x = jax.random.uniform(key, (batch,), dtype=jnp.float32) * 1000.0
    div_term = make_div_term(embedding_dim)

    out = jax.block_until_ready(step_embedding(x, div_term))
    ref = step_embedding_ref(x, div_term)
    assert out.shape == (batch, embedding_dim)
    assert jnp.allclose(out, ref, atol=1e-5, rtol=1e-5)

    # Lane-packed multi-block path with a ragged final block (P=625 -> grid=2).
    x_big = jax.random.uniform(jax.random.PRNGKey(1), (2500,), dtype=jnp.float32) * 1000.0
    out_big = jax.block_until_ready(step_embedding(x_big, div_term))
    assert out_big.shape == (2500, embedding_dim)
    assert jnp.allclose(out_big, step_embedding_ref(x_big, div_term), atol=1e-5, rtol=1e-5)

    # Fallback (g=1) path: B not divisible by 128 // emb_dim, partial last block.
    x_odd = jax.random.uniform(jax.random.PRNGKey(2), (10,), dtype=jnp.float32) * 1000.0
    out_odd = jax.block_until_ready(step_embedding(x_odd, div_term))
    assert jnp.allclose(out_odd, step_embedding_ref(x_odd, div_term), atol=1e-5, rtol=1e-5)

    # Wide-embedding path with 128-aligned sliced stores (half % 128 == 0).
    div_wide = make_div_term(256)
    x_w = jax.random.uniform(jax.random.PRNGKey(3), (64,), dtype=jnp.float32) * 1000.0
    out_w = jax.block_until_ready(step_embedding(x_w, div_wide))
    assert out_w.shape == (64, 256)
    assert jnp.allclose(out_w, step_embedding_ref(x_w, div_wide), atol=1e-5, rtol=1e-5)

    print("KERNEL_OK")
</pallas_src>

<mosaic_0001>
module attributes {stable_mosaic.version = 11 : i64} {
  func.func @_step_embedding_kernel(%arg0: i32, %arg1: memref<2x4xf32, #tpu.memory_space<vmem>>, %arg2: memref<1x16xf32, #tpu.memory_space<vmem>>, %arg3: memref<2x128xf32, #tpu.memory_space<vmem>>) attributes {dimension_semantics = [#tpu.dimension_semantics<parallel>], iteration_bounds = array<i64: 1>, scalar_prefetch = 0 : i64, scratch_operands = 0 : i64, tpu.core_type = #tpu.core_type<tc>, window_params = [{transform_indices = @transform_0, window_bounds = array<i64: 2, 4>}, {pipeline_mode = #tpu.pipeline_mode<synchronous>, transform_indices = @transform_1, window_bounds = array<i64: 1, 16>}, {transform_indices = @transform_2, window_bounds = array<i64: 2, 128>}]} {
    %c0 = arith.constant 0 : index
    %c0_0 = arith.constant 0 : index
    %0 = vector.load %arg2[%c0, %c0_0] : memref<1x16xf32, #tpu.memory_space<vmem>>, vector<1x16xf32>
    %c0_1 = arith.constant 0 : index
    %c0_2 = arith.constant 0 : index
    %1 = vector.load %arg1[%c0_1, %c0_2] : memref<2x4xf32, #tpu.memory_space<vmem>>, vector<2x1xf32>
    %2 = vector.broadcast %1 : vector<2x1xf32> to vector<2x16xf32>
    %3 = vector.broadcast %0 : vector<1x16xf32> to vector<2x16xf32>
    %4 = arith.mulf %2, %3 : vector<2x16xf32>
    %5 = math.sin %4 : vector<2x16xf32>
    %6 = math.cos %4 : vector<2x16xf32>
    %c0_3 = arith.constant 0 : index
    %c1 = arith.constant 1 : index
    %7 = vector.load %arg1[%c0_3, %c1] : memref<2x4xf32, #tpu.memory_space<vmem>>, vector<2x1xf32>
    %8 = vector.broadcast %7 : vector<2x1xf32> to vector<2x16xf32>
    %9 = vector.broadcast %0 : vector<1x16xf32> to vector<2x16xf32>
    %10 = arith.mulf %8, %9 : vector<2x16xf32>
    %11 = math.sin %10 : vector<2x16xf32>
    %12 = math.cos %10 : vector<2x16xf32>
    %c0_4 = arith.constant 0 : index
    %c2 = arith.constant 2 : index
    %13 = vector.load %arg1[%c0_4, %c2] : memref<2x4xf32, #tpu.memory_space<vmem>>, vector<2x1xf32>
    %14 = vector.broadcast %13 : vector<2x1xf32> to vector<2x16xf32>
    %15 = vector.broadcast %0 : vector<1x16xf32> to vector<2x16xf32>
    %16 = arith.mulf %14, %15 : vector<2x16xf32>
    %17 = math.sin %16 : vector<2x16xf32>
    %18 = math.cos %16 : vector<2x16xf32>
    %c0_5 = arith.constant 0 : index
    %c3 = arith.constant 3 : index
    %19 = vector.load %arg1[%c0_5, %c3] : memref<2x4xf32, #tpu.memory_space<vmem>>, vector<2x1xf32>
    %20 = vector.broadcast %19 : vector<2x1xf32> to vector<2x16xf32>
    %21 = vector.broadcast %0 : vector<1x16xf32> to vector<2x16xf32>
    %22 = arith.mulf %20, %21 : vector<2x16xf32>
    %23 = math.sin %22 : vector<2x16xf32>
    %24 = math.cos %22 : vector<2x16xf32>
    %25 = tpu.concatenate %5, %6, %11, %12, %17, %18, %23, %24 in 1 : vector<2x16xf32>, vector<2x16xf32>, vector<2x16xf32>, vector<2x16xf32>, vector<2x16xf32>, vector<2x16xf32>, vector<2x16xf32>, vector<2x16xf32> -> vector<2x128xf32>
    %c0_6 = arith.constant 0 : index
    %c0_7 = arith.constant 0 : index
    %26 = vector.load %arg3[%c0_6, %c0_7] : memref<2x128xf32, #tpu.memory_space<vmem>>, vector<2x128xf32>
    tpu.vector_store %arg3[%c0_6, %c0_7], %25 {strides = array<i32>} : memref<2x128xf32, #tpu.memory_space<vmem>>, vector<2x128xf32>,
    return
  }
  func.func @transform_0(%arg0: i32) -> (i32, i32) {
    %c0_i32 = arith.constant 0 : i32
    %c0_i32_0 = arith.constant 0 : i32
    return %arg0, %c0_i32 : i32, i32
  }
  func.func @transform_1(%arg0: i32) -> (i32, i32) {
    %c0_i32 = arith.constant 0 : i32
    %c0_i32_0 = arith.constant 0 : i32
    %c0_i32_1 = arith.constant 0 : i32
    return %c0_i32, %c0_i32_0 : i32, i32
  }
  func.func @transform_2(%arg0: i32) -> (i32, i32) {
    %c0_i32 = arith.constant 0 : i32
    %c0_i32_0 = arith.constant 0 : i32
    return %arg0, %c0_i32 : i32, i32
  }
}

</mosaic_0001>

<llo_original>
// kernel: tpu_custom_call.1
$region0: #{tpu_custom_call.1}
  #allocation0 [shape = 'u32[]', space=smem, size = 0x4, offset = 0x4, fixed_abs, tag = 'smem constant byte address 0x4 - core index']
  #allocation1 [shape = 'u32[144,128]{1,0:T(1,128)}', space=vmem, size = 0x12000, scoped, tag = 'internal scratch']
  %s0 = inlined_call_operand.hbm [shape: f32[2,4], index: 0, kind: input, shape index: {}]
  %s1 = inlined_call_operand.vmem [shape: f32[1,16], index: 1, kind: input, shape index: {}]
  %s2 = inlined_call_operand.hbm [shape: f32[2,128], index: 2, kind: output, shape index: {}]
  %s3 = sld [smem:[#allocation0]]
  $region22: #{tpu_custom_call.1} parent=0
    _
  %s5 = ssub.s32 1, %s3
  %s6 = scalar_select 0, %s5, %s3
  $region1: #{tpu_custom_call.1} parent=0
    #allocation2 [shape = 'u8[1024]{0}', space=vmem, size = 0x400, scoped, tag = 'input window, operand 0, single buffered']
    #allocation3 [shape = 's32[1]{0}', space=sflag, size = 0x4, scoped, tag = 'scoped memory for tpu_custom_call.1']
    #allocation4 [shape = 's32[1]{0}', space=sflag, size = 0x4, scoped, tag = 'scoped memory for tpu_custom_call.1']
    #allocation5 [shape = 'u8[1024]{0}', space=vmem, size = 0x400, scoped, tag = 'output window, operand 0, single buffered']
    %7 = vsyncpa [#allocation3], 0
    %8 = vsyncpa [#allocation4], 0
    // Predicated region
    $region2: #{tpu_custom_call.1} parent=1 // pred_check
      _
    $region3: #{tpu_custom_call.1} parent=1 // pred_check_branch
      %10 = sbr.rel (0) target = $region5
    $region4: #{tpu_custom_call.1} parent=1 // pred_region
      %s12 = ssub.s32 32, 32
      %13 = vsyncadd [#allocation3], %s12
      %s15 = sshll.u32 [#allocation2], 4
      %s16 = int_to_ptr.vmem [resolvable:$true] %s15
      %18 = dma.hbm_to_vmem [thread:$0]  %s0, 32, %s16, [#allocation3]
    $region5: #{tpu_custom_call.1} parent=1 // pred_fallthru
      _
    // Predicated region
    $region6: #{tpu_custom_call.1} parent=1 // pred_check
      _
    $region7: #{tpu_custom_call.1} parent=1 // pred_check_branch
      %20 = sbr.rel (0) target = $region9
    $region8: #{tpu_custom_call.1} parent=1 // pred_region
      _
    $region9: #{tpu_custom_call.1} parent=1 // pred_fallthru
      _
    // Predicated region
    $region10: #{tpu_custom_call.1} parent=1 // pred_check
      _
    $region11: #{tpu_custom_call.1} parent=1 // pred_check_branch
      %22 = sbr.rel (0) target = $region13
    $region12: #{tpu_custom_call.1} parent=1 // pred_region
      %23 = dma.done [#allocation3], 32
    $region13: #{tpu_custom_call.1} parent=1 // pred_fallthru
      _
    %v24 = vld [vmem:[%s1] sm:$0x1]
    %v25 = vld [vmem:[#allocation2] sm:$0x3]
    %27 = vset.pattern.permute.xlu0 0
    %28 = vperm.xlu0 %27, %v25
    %v29 = vpop.permute.xlu0 %28
    %v32 = vlaneseq
    %v33 = vshrl.u32 %v32, 7
    %v34 = vsub.s32 0, %v33
    %v35 = vrot.slane %v24, %v34
    %v37 = vmul.f32 %v29, %v35
    %v38 = vand.u32 2147483647, %v37
    %vm39 = vcmp.le.f32.partialorder %v38, 0.7853982
    %vm40 = vcmp.lt.s32.totalorder %v37, 0
    %v41 = vand.u32 %v37, 2139095040
    %v42 = vshrl.u32 %v41, 23
    %v43 = vsub.s32 %v42, 127
    %v44 = vand.u32 2147483647, %v37
    %v45 = vand.u32 %v44, 8388607
    %v46 = vor.u32 %v45, 8388608
    %v47 = vsub.s32 0, %v46
    %v48 = vadd.s32 %v43, 1
    %vm49 = vcmp.gt.s32.totalorder %v48, 0
    %v50 = vsel %vm49, %v48, 0
    %v51 = vshrl.u32 %v50, 5
    %v52 = vand.u32 %v50, 31
    %v53 = vsub.s32 32, %v52
    %v54 = vshrl.u32 683565275, %v53
    %v55 = vshll.u32 683565275, %v52
    %v56 = vshrl.u32 2475754826, %v53
    %v57 = vor.u32 %v55, %v56
    %v58 = vshll.u32 2475754826, %v52
    %v59 = vshrl.u32 2131351028, %v53
    %v60 = vor.u32 %v58, %v59
    %v61 = vshll.u32 2131351028, %v52
    %v62 = vshrl.u32 2102212464, %v53
    %v63 = vor.u32 %v61, %v62
    %v64 = vshll.u32 2102212464, %v52
    %v65 = vshrl.u32 920167782, %v53
    %v66 = vor.u32 %v64, %v65
    %v67 = vshll.u32 920167782, %v52
    %v68 = vshrl.u32 1326507024, %v53
    %v69 = vor.u32 %v67, %v68
    %vm70 = vcmp.lt.s32.totalorder %v51, 1
    %vm71 = vcmp.lt.s32.totalorder %v51, 2
    %vm72 = vcmp.lt.s32.totalorder %v51, 3
    %vm73 = vcmp.lt.s32.totalorder %v51, 4
    %v74 = vsel %vm70, %v54, %v57
    %v75 = vsel %vm73, %v63, 2102212464
    %v76 = vsel %vm72, %v60, %v75
    %v77 = vsel %vm71, %v74, %v76
    %v78 = vsel %vm70, %v57, %v60
    %v79 = vsel %vm73, %v66, 920167782
    %v80 = vsel %vm72, %v63, %v79
    %v81 = vsel %vm71, %v78, %v80
    %v82 = vsel %vm70, %v60, %v63
    %v83 = vsel %vm73, %v69, 1326507024
    %v84 = vsel %vm72, %v66, %v83
    %v85 = vsel %vm71, %v82, %v84
    %v86 = vshll.u32 %v46, 8
    %v87 = vmul.u32.u64.compose %v86, %v85
    %v88 = vextract.low.u32 %v87
    %v89 = vextract.high.u32 %v87
    %v90 = vmul.u32.u64.compose %v86, %v81
    %v91 = vextract.low.u32 %v90
    %v92 = vextract.high.u32 %v90
    %v93 = vmul.u32 %v86, %v77
    %v94 = vadd.s32 %v89, %v91
    %vm95 = vc.u32 %v89, %v91
    %v96 = vadd.s32 %v92, 1
    %v97 = vsel %vm95, %v96, %v92
    %v98 = vadd.s32 %v93, %v97
    %v99 = vadd.s32 %v98, 536870912
    %v100 = vshrl.u32 %v99, 30
    %v101 = vshll.u32 %v100, 30
    %v102 = vsub.s32 %v98, %v101
    %vm103 = vcmp.lt.s32.totalorder %v102, 0
    %v104 = vsub.s32 0, %v102
    %v105 = vsel %vm103, %v104, %v102
    %v106 = vclz %v105
    %v107 = vsub.s32 %v106, 2
    %vm108 = vcmp.gt.s32.totalorder 0, %v107
    %v109 = vsel %vm108, 0, %v107
    %v110 = vsub.s32 32, %v109
    %v111 = vshll.u32 %v102, %v109
    %v112 = vshrl.u32 %v94, %v110
    %v113 = vor.u32 %v111, %v112
    %v114 = vsub.s32 4294967266, %v109
    %v115 = vadd.s32 %v114, 127
    %v116 = vshll.u32 %v115, 23
    %v117 = vor.u32 4788187, %v116
    %v118 = vand.u32 2147483647, %v117
    %v120 = vcvt.s32.f32 %v113
    %v121 = vmul.f32 %v120, %v118
    %v122 = vxor.u32 %v121, 2147483648
    %v123 = vsel %vm40, %v122, %v121
    %v124 = vsub.s32 4, %v100
    %v125 = vsel %vm40, %v124, %v100
    %v126 = vsel %vm39, %v37, %v123
    %v127 = vsel %vm39, 0, %v125
    %v128 = vcosq.f32.pop %v126
    %v129 = vsinq.f32.pop %v126
    %vm130 = vweird.f32 %v37
    %v131 = vadd.s32 %v127, 3
    %v132 = vand.u32 %v131, 3
    %vm133 = vcmp.lt.s32.totalorder %v132, 2
    %vm134 = vcmp.eq.s32.totalorder %v132, 0
    %v135 = vxor.u32 %v129, 2147483648
    %v136 = vsel %vm134, %v128, %v135
    %vm137 = vcmp.eq.s32.totalorder %v132, 2
    %v138 = vxor.u32 %v128, 2147483648
    %v139 = vsel %vm137, %v138, %v129
    %v140 = vsel %vm133, %v136, %v139
    %v141 = vsel %vm130, nan, %v140
    %v142 = vand.u32 2147483647, %v37
    %vm143 = vcmp.le.f32.partialorder %v142, 0.7853982
    %vm144 = vcmp.lt.s32.totalorder %v37, 0
    %v145 = vand.u32 %v37, 2139095040
    %v146 = vshrl.u32 %v145, 23
    %v147 = vsub.s32 %v146, 127
    %v148 = vand.u32 2147483647, %v37
    %v149 = vand.u32 %v148, 8388607
    %v150 = vor.u32 %v149, 8388608
    %v151 = vsub.s32 0, %v150
    %v152 = vadd.s32 %v147, 1
    %vm153 = vcmp.gt.s32.totalorder %v152, 0
    %v154 = vsel %vm153, %v152, 0
    %v155 = vshrl.u32 %v154, 5
    %v156 = vand.u32 %v154, 31
    %v157 = vsub.s32 32, %v156
    %v158 = vshrl.u32 683565275, %v157
    %v159 = vshll.u32 683565275, %v156
    %v160 = vshrl.u32 2475754826, %v157
    %v161 = vor.u32 %v159, %v160
    %v162 = vshll.u32 2475754826, %v156
    %v163 = vshrl.u32 2131351028, %v157
    %v164 = vor.u32 %v162, %v163
    %v165 = vshll.u32 2131351028, %v156
    %v166 = vshrl.u32 2102212464, %v157
    %v167 = vor.u32 %v165, %v166
    %v168 = vshll.u32 2102212464, %v156
    %v169 = vshrl.u32 920167782, %v157
    %v170 = vor.u32 %v168, %v169
    %v171 = vshll.u32 920167782, %v156
    %v172 = vshrl.u32 1326507024, %v157
    %v173 = vor.u32 %v171, %v172
    %vm174 = vcmp.lt.s32.totalorder %v155, 1
    %vm175 = vcmp.lt.s32.totalorder %v155, 2
    %vm176 = vcmp.lt.s32.totalorder %v155, 3
    %vm177 = vcmp.lt.s32.totalorder %v155, 4
    %v178 = vsel %vm174, %v158, %v161
    %v179 = vsel %vm177, %v167, 2102212464
    %v180 = vsel %vm176, %v164, %v179
    %v181 = vsel %vm175, %v178, %v180
    %v182 = vsel %vm174, %v161, %v164
    %v183 = vsel %vm177, %v170, 920167782
    %v184 = vsel %vm176, %v167, %v183
    %v185 = vsel %vm175, %v182, %v184
    %v186 = vsel %vm174, %v164, %v167
    %v187 = vsel %vm177, %v173, 1326507024
    %v188 = vsel %vm176, %v170, %v187
    %v189 = vsel %vm175, %v186, %v188
    %v190 = vshll.u32 %v150, 8
    %v191 = vmul.u32.u64.compose %v190, %v189
    %v192 = vextract.low.u32 %v191
    %v193 = vextract.high.u32 %v191
    %v194 = vmul.u32.u64.compose %v190, %v185
    %v195 = vextract.low.u32 %v194
    %v196 = vextract.high.u32 %v194
    %v197 = vmul.u32 %v190, %v181
    %v198 = vadd.s32 %v193, %v195
    %vm199 = vc.u32 %v193, %v195
    %v200 = vadd.s32 %v196, 1
    %v201 = vsel %vm199, %v200, %v196
    %v202 = vadd.s32 %v197, %v201
    %v203 = vadd.s32 %v202, 536870912
    %v204 = vshrl.u32 %v203, 30
    %v205 = vshll.u32 %v204, 30
    %v206 = vsub.s32 %v202, %v205
    %vm207 = vcmp.lt.s32.totalorder %v206, 0
    %v208 = vsub.s32 0, %v206
    %v209 = vsel %vm207, %v208, %v206
    %v210 = vclz %v209
    %v211 = vsub.s32 %v210, 2
    %vm212 = vcmp.gt.s32.totalorder 0, %v211
    %v213 = vsel %vm212, 0, %v211
    %v214 = vsub.s32 32, %v213
    %v215 = vshll.u32 %v206, %v213
    %v216 = vshrl.u32 %v198, %v214
    %v217 = vor.u32 %v215, %v216
    %v218 = vsub.s32 4294967266, %v213
    %v219 = vadd.s32 %v218, 127
    %v220 = vshll.u32 %v219, 23
    %v221 = vor.u32 4788187, %v220
    %v222 = vand.u32 2147483647, %v221
    %v224 = vcvt.s32.f32 %v217
    %v225 = vmul.f32 %v224, %v222
    %v226 = vxor.u32 %v225, 2147483648
    %v227 = vsel %vm144, %v226, %v225
    %v228 = vsub.s32 4, %v204
    %v229 = vsel %vm144, %v228, %v204
    %v230 = vsel %vm143, %v37, %v227
    %v231 = vsel %vm143, 0, %v229
    %v232 = vcosq.f32.pop %v230
    %v233 = vsinq.f32.pop %v230
    %vm234 = vweird.f32 %v37
    %v235 = vand.u32 %v231, 3
    %vm236 = vcmp.lt.s32.totalorder %v235, 2
    %vm237 = vcmp.eq.s32.totalorder %v235, 0
    %v238 = vxor.u32 %v233, 2147483648
    %v239 = vsel %vm237, %v232, %v238
    %vm240 = vcmp.eq.s32.totalorder %v235, 2
    %v241 = vxor.u32 %v232, 2147483648
    %v242 = vsel %vm240, %v241, %v233
    %v243 = vsel %vm236, %v239, %v242
    %v244 = vsel %vm234, nan, %v243
    %245 = vset.pattern.permute.xlu0 1
    %246 = vperm.xlu0 %245, %v25
    %v247 = vpop.permute.xlu0 %246
    %v249 = vmul.f32 %v247, %v35
    %v250 = vand.u32 2147483647, %v249
    %vm251 = vcmp.le.f32.partialorder %v250, 0.7853982
    %vm252 = vcmp.lt.s32.totalorder %v249, 0
    %v253 = vand.u32 %v249, 2139095040
    %v254 = vshrl.u32 %v253, 23
    %v255 = vsub.s32 %v254, 127
    %v256 = vand.u32 2147483647, %v249
    %v257 = vand.u32 %v256, 8388607
    %v258 = vor.u32 %v257, 8388608
    %v259 = vsub.s32 0, %v258
    %v260 = vadd.s32 %v255, 1
    %vm261 = vcmp.gt.s32.totalorder %v260, 0
    %v262 = vsel %vm261, %v260, 0
    %v263 = vshrl.u32 %v262, 5
    %v264 = vand.u32 %v262, 31
    %v265 = vsub.s32 32, %v264
    %v266 = vshrl.u32 683565275, %v265
    %v267 = vshll.u32 683565275, %v264
    %v268 = vshrl.u32 2475754826, %v265
    %v269 = vor.u32 %v267, %v268
    %v270 = vshll.u32 2475754826, %v264
    %v271 = vshrl.u32 2131351028, %v265
    %v272 = vor.u32 %v270, %v271
    %v273 = vshll.u32 2131351028, %v264
    %v274 = vshrl.u32 2102212464, %v265
    %v275 = vor.u32 %v273, %v274
    %v276 = vshll.u32 2102212464, %v264
    %v277 = vshrl.u32 920167782, %v265
    %v278 = vor.u32 %v276, %v277
    %v279 = vshll.u32 920167782, %v264
    %v280 = vshrl.u32 1326507024, %v265
    %v281 = vor.u32 %v279, %v280
    %vm282 = vcmp.lt.s32.totalorder %v263, 1
    %vm283 = vcmp.lt.s32.totalorder %v263, 2
    %vm284 = vcmp.lt.s32.totalorder %v263, 3
    %vm285 = vcmp.lt.s32.totalorder %v263, 4
    %v286 = vsel %vm282, %v266, %v269
    %v287 = vsel %vm285, %v275, 2102212464
    %v288 = vsel %vm284, %v272, %v287
    %v289 = vsel %vm283, %v286, %v288
    %v290 = vsel %vm282, %v269, %v272
    %v291 = vsel %vm285, %v278, 920167782
    %v292 = vsel %vm284, %v275, %v291
    %v293 = vsel %vm283, %v290, %v292
    %v294 = vsel %vm282, %v272, %v275
    %v295 = vsel %vm285, %v281, 1326507024
    %v296 = vsel %vm284, %v278, %v295
    %v297 = vsel %vm283, %v294, %v296
    %v298 = vshll.u32 %v258, 8
    %v299 = vmul.u32.u64.compose %v298, %v297
    %v300 = vextract.low.u32 %v299
    %v301 = vextract.high.u32 %v299
    %v302 = vmul.u32.u64.compose %v298, %v293
    %v303 = vextract.low.u32 %v302
    %v304 = vextract.high.u32 %v302
    %v305 = vmul.u32 %v298, %v289
    %v306 = vadd.s32 %v301, %v303
    %vm307 = vc.u32 %v301, %v303
    %v308 = vadd.s32 %v304, 1
    %v309 = vsel %vm307, %v308, %v304
    %v310 = vadd.s32 %v305, %v309
    %v311 = vadd.s32 %v310, 536870912
    %v312 = vshrl.u32 %v311, 30
    %v313 = vshll.u32 %v312, 30
    %v314 = vsub.s32 %v310, %v313
    %vm315 = vcmp.lt.s32.totalorder %v314, 0
    %v316 = vsub.s32 0, %v314
    %v317 = vsel %vm315, %v316, %v314
    %v318 = vclz %v317
    %v319 = vsub.s32 %v318, 2
    %vm320 = vcmp.gt.s32.totalorder 0, %v319
    %v321 = vsel %vm320, 0, %v319
    %v322 = vsub.s32 32, %v321
    %v323 = vshll.u32 %v314, %v321
    %v324 = vshrl.u32 %v306, %v322
    %v325 = vor.u32 %v323, %v324
    %v326 = vsub.s32 4294967266, %v321
    %v327 = vadd.s32 %v326, 127
    %v328 = vshll.u32 %v327, 23
    %v329 = vor.u32 4788187, %v328
    %v330 = vand.u32 2147483647, %v329
    %v332 = vcvt.s32.f32 %v325
    %v333 = vmul.f32 %v332, %v330
    %v334 = vxor.u32 %v333, 2147483648
    %v335 = vsel %vm252, %v334, %v333
    %v336 = vsub.s32 4, %v312
    %v337 = vsel %vm252, %v336, %v312
    %v338 = vsel %vm251, %v249, %v335
    %v339 = vsel %vm251, 0, %v337
    %v340 = vcosq.f32.pop %v338
    %v341 = vsinq.f32.pop %v338
    %vm342 = vweird.f32 %v249
    %v343 = vadd.s32 %v339, 3
    %v344 = vand.u32 %v343, 3
    %vm345 = vcmp.lt.s32.totalorder %v344, 2
    %vm346 = vcmp.eq.s32.totalorder %v344, 0
    %v347 = vxor.u32 %v341, 2147483648
    %v348 = vsel %vm346, %v340, %v347
    %vm349 = vcmp.eq.s32.totalorder %v344, 2
    %v350 = vxor.u32 %v340, 2147483648
    %v351 = vsel %vm349, %v350, %v341
    %v352 = vsel %vm345, %v348, %v351
    %v353 = vsel %vm342, nan, %v352
    %v354 = vand.u32 2147483647, %v249
    %vm355 = vcmp.le.f32.partialorder %v354, 0.7853982
    %vm356 = vcmp.lt.s32.totalorder %v249, 0
    %v357 = vand.u32 %v249, 2139095040
    %v358 = vshrl.u32 %v357, 23
    %v359 = vsub.s32 %v358, 127
    %v360 = vand.u32 2147483647, %v249
    %v361 = vand.u32 %v360, 8388607
    %v362 = vor.u32 %v361, 8388608
    %v363 = vsub.s32 0, %v362
    %v364 = vadd.s32 %v359, 1
    %vm365 = vcmp.gt.s32.totalorder %v364, 0
    %v366 = vsel %vm365, %v364, 0
    %v367 = vshrl.u32 %v366, 5
    %v368 = vand.u32 %v366, 31
    %v369 = vsub.s32 32, %v368
    %v370 = vshrl.u32 683565275, %v369
    %v371 = vshll.u32 683565275, %v368
    %v372 = vshrl.u32 2475754826, %v369
    %v373 = vor.u32 %v371, %v372
    %v374 = vshll.u32 2475754826, %v368
    %v375 = vshrl.u32 2131351028, %v369
    %v376 = vor.u32 %v374, %v375
    %v377 = vshll.u32 2131351028, %v368
    %v378 = vshrl.u32 2102212464, %v369
    %v379 = vor.u32 %v377, %v378
    %v380 = vshll.u32 2102212464, %v368
    %v381 = vshrl.u32 920167782, %v369
    %v382 = vor.u32 %v380, %v381
    %v383 = vshll.u32 920167782, %v368
    %v384 = vshrl.u32 1326507024, %v369
    %v385 = vor.u32 %v383, %v384
    %vm386 = vcmp.lt.s32.totalorder %v367, 1
    %vm387 = vcmp.lt.s32.totalorder %v367, 2
    %vm388 = vcmp.lt.s32.totalorder %v367, 3
    %vm389 = vcmp.lt.s32.totalorder %v367, 4
    %v390 = vsel %vm386, %v370, %v373
    %v391 = vsel %vm389, %v379, 2102212464
    %v392 = vsel %vm388, %v376, %v391
    %v393 = vsel %vm387, %v390, %v392
    %v394 = vsel %vm386, %v373, %v376
    %v395 = vsel %vm389, %v382, 920167782
    %v396 = vsel %vm388, %v379, %v395
    %v397 = vsel %vm387, %v394, %v396
    %v398 = vsel %vm386, %v376, %v379
    %v399 = vsel %vm389, %v385, 1326507024
    %v400 = vsel %vm388, %v382, %v399
    %v401 = vsel %vm387, %v398, %v400
    %v402 = vshll.u32 %v362, 8
    %v403 = vmul.u32.u64.compose %v402, %v401
    %v404 = vextract.low.u32 %v403
    %v405 = vextract.high.u32 %v403
    %v406 = vmul.u32.u64.compose %v402, %v397
    %v407 = vextract.low.u32 %v406
    %v408 = vextract.high.u32 %v406
    %v409 = vmul.u32 %v402, %v393
    %v410 = vadd.s32 %v405, %v407
    %vm411 = vc.u32 %v405, %v407
    %v412 = vadd.s32 %v408, 1
    %v413 = vsel %vm411, %v412, %v408
    %v414 = vadd.s32 %v409, %v413
    %v415 = vadd.s32 %v414, 536870912
    %v416 = vshrl.u32 %v415, 30
    %v417 = vshll.u32 %v416, 30
    %v418 = vsub.s32 %v414, %v417
    %vm419 = vcmp.lt.s32.totalorder %v418, 0
    %v420 = vsub.s32 0, %v418
    %v421 = vsel %vm419, %v420, %v418
    %v422 = vclz %v421
    %v423 = vsub.s32 %v422, 2
    %vm424 = vcmp.gt.s32.totalorder 0, %v423
    %v425 = vsel %vm424, 0, %v423
    %v426 = vsub.s32 32, %v425
    %v427 = vshll.u32 %v418, %v425
    %v428 = vshrl.u32 %v410, %v426
    %v429 = vor.u32 %v427, %v428
    %v430 = vsub.s32 4294967266, %v425
    %v431 = vadd.s32 %v430, 127
    %v432 = vshll.u32 %v431, 23
    %v433 = vor.u32 4788187, %v432
    %v434 = vand.u32 2147483647, %v433
    %v436 = vcvt.s32.f32 %v429
    %v437 = vmul.f32 %v436, %v434
    %v438 = vxor.u32 %v437, 2147483648
    %v439 = vsel %vm356, %v438, %v437
    %v440 = vsub.s32 4, %v416
    %v441 = vsel %vm356, %v440, %v416
    %v442 = vsel %vm355, %v249, %v439
    %v443 = vsel %vm355, 0, %v441
    %v444 = vcosq.f32.pop %v442
    %v445 = vsinq.f32.pop %v442
    %vm446 = vweird.f32 %v249
    %v447 = vand.u32 %v443, 3
    %vm448 = vcmp.lt.s32.totalorder %v447, 2
    %vm449 = vcmp.eq.s32.totalorder %v447, 0
    %v450 = vxor.u32 %v445, 2147483648
    %v451 = vsel %vm449, %v444, %v450
    %vm452 = vcmp.eq.s32.totalorder %v447, 2
    %v453 = vxor.u32 %v444, 2147483648
    %v454 = vsel %vm452, %v453, %v445
    %v455 = vsel %vm448, %v451, %v454
    %v456 = vsel %vm446, nan, %v455
    %457 = vset.pattern.permute.xlu0 2
    %458 = vperm.xlu0 %457, %v25
    %v459 = vpop.permute.xlu0 %458
    %v461 = vmul.f32 %v459, %v35
    %v462 = vand.u32 2147483647, %v461
    %vm463 = vcmp.le.f32.partialorder %v462, 0.7853982
    %vm464 = vcmp.lt.s32.totalorder %v461, 0
    %v465 = vand.u32 %v461, 2139095040
    %v466 = vshrl.u32 %v465, 23
    %v467 = vsub.s32 %v466, 127
    %v468 = vand.u32 2147483647, %v461
    %v469 = vand.u32 %v468, 8388607
    %v470 = vor.u32 %v469, 8388608
    %v471 = vsub.s32 0, %v470
    %v472 = vadd.s32 %v467, 1
    %vm473 = vcmp.gt.s32.totalorder %v472, 0
    %v474 = vsel %vm473, %v472, 0
    %v475 = vshrl.u32 %v474, 5
    %v476 = vand.u32 %v474, 31
    %v477 = vsub.s32 32, %v476
    %v478 = vshrl.u32 683565275, %v477
    %v479 = vshll.u32 683565275, %v476
    %v480 = vshrl.u32 2475754826, %v477
    %v481 = vor.u32 %v479, %v480
    %v482 = vshll.u32 2475754826, %v476
    %v483 = vshrl.u32 2131351028, %v477
    %v484 = vor.u32 %v482, %v483
    %v485 = vshll.u32 2131351028, %v476
    %v486 = vshrl.u32 2102212464, %v477
    %v487 = vor.u32 %v485, %v486
    %v488 = vshll.u32 2102212464, %v476
    %v489 = vshrl.u32 920167782, %v477
    %v490 = vor.u32 %v488, %v489
    %v491 = vshll.u32 920167782, %v476
    %v492 = vshrl.u32 1326507024, %v477
    %v493 = vor.u32 %v491, %v492
    %vm494 = vcmp.lt.s32.totalorder %v475, 1
    %vm495 = vcmp.lt.s32.totalorder %v475, 2
    %vm496 = vcmp.lt.s32.totalorder %v475, 3
    %vm497 = vcmp.lt.s32.totalorder %v475, 4
    %v498 = vsel %vm494, %v478, %v481
    %v499 = vsel %vm497, %v487, 2102212464
    %v500 = vsel %vm496, %v484, %v499
    %v501 = vsel %vm495, %v498, %v500
    %v502 = vsel %vm494, %v481, %v484
    %v503 = vsel %vm497, %v490, 920167782
    %v504 = vsel %vm496, %v487, %v503
    %v505 = vsel %vm495, %v502, %v504
    %v506 = vsel %vm494, %v484, %v487
    %v507 = vsel %vm497, %v493, 1326507024
    %v508 = vsel %vm496, %v490, %v507
    %v509 = vsel %vm495, %v506, %v508
    %v510 = vshll.u32 %v470, 8
    %v511 = vmul.u32.u64.compose %v510, %v509
    %v512 = vextract.low.u32 %v511
    %v513 = vextract.high.u32 %v511
    %v514 = vmul.u32.u64.compose %v510, %v505
    %v515 = vextract.low.u32 %v514
    %v516 = vextract.high.u32 %v514
    %v517 = vmul.u32 %v510, %v501
    %v518 = vadd.s32 %v513, %v515
    %vm519 = vc.u32 %v513, %v515
    %v520 = vadd.s32 %v516, 1
    %v521 = vsel %vm519, %v520, %v516
    %v522 = vadd.s32 %v517, %v521
    %v523 = vadd.s32 %v522, 536870912
    %v524 = vshrl.u32 %v523, 30
    %v525 = vshll.u32 %v524, 30
    %v526 = vsub.s32 %v522, %v525
    %vm527 = vcmp.lt.s32.totalorder %v526, 0
    %v528 = vsub.s32 0, %v526
    %v529 = vsel %vm527, %v528, %v526
    %v530 = vclz %v529
    %v531 = vsub.s32 %v530, 2
    %vm532 = vcmp.gt.s32.totalorder 0, %v531
    %v533 = vsel %vm532, 0, %v531
    %v534 = vsub.s32 32, %v533
    %v535 = vshll.u32 %v526, %v533
    %v536 = vshrl.u32 %v518, %v534
    %v537 = vor.u32 %v535, %v536
    %v538 = vsub.s32 4294967266, %v533
    %v539 = vadd.s32 %v538, 127
    %v540 = vshll.u32 %v539, 23
    %v541 = vor.u32 4788187, %v540
    %v542 = vand.u32 2147483647, %v541
    %v544 = vcvt.s32.f32 %v537
    %v545 = vmul.f32 %v544, %v542
    %v546 = vxor.u32 %v545, 2147483648
    %v547 = vsel %vm464, %v546, %v545
    %v548 = vsub.s32 4, %v524
    %v549 = vsel %vm464, %v548, %v524
    %v550 = vsel %vm463, %v461, %v547
    %v551 = vsel %vm463, 0, %v549
    %v552 = vcosq.f32.pop %v550
    %v553 = vsinq.f32.pop %v550
    %vm554 = vweird.f32 %v461
    %v555 = vadd.s32 %v551, 3
    %v556 = vand.u32 %v555, 3
    %vm557 = vcmp.lt.s32.totalorder %v556, 2
    %vm558 = vcmp.eq.s32.totalorder %v556, 0
    %v559 = vxor.u32 %v553, 2147483648
    %v560 = vsel %vm558, %v552, %v559
    %vm561 = vcmp.eq.s32.totalorder %v556, 2
    %v562 = vxor.u32 %v552, 2147483648
    %v563 = vsel %vm561, %v562, %v553
    %v564 = vsel %vm557, %v560, %v563
    %v565 = vsel %vm554, nan, %v564
    %v566 = vand.u32 2147483647, %v461
    %vm567 = vcmp.le.f32.partialorder %v566, 0.7853982
    %vm568 = vcmp.lt.s32.totalorder %v461, 0
    %v569 = vand.u32 %v461, 2139095040
    %v570 = vshrl.u32 %v569, 23
    %v571 = vsub.s32 %v570, 127
    %v572 = vand.u32 2147483647, %v461
    %v573 = vand.u32 %v572, 8388607
    %v574 = vor.u32 %v573, 8388608
    %v575 = vsub.s32 0, %v574
    %v576 = vadd.s32 %v571, 1
    %vm577 = vcmp.gt.s32.totalorder %v576, 0
    %v578 = vsel %vm577, %v576, 0
    %v579 = vshrl.u32 %v578, 5
    %v580 = vand.u32 %v578, 31
    %v581 = vsub.s32 32, %v580
    %v582 = vshrl.u32 683565275, %v581
    %v583 = vshll.u32 683565275, %v580
    %v584 = vshrl.u32 2475754826, %v581
    %v585 = vor.u32 %v583, %v584
    %v586 = vshll.u32 2475754826, %v580
    %v587 = vshrl.u32 2131351028, %v581
    %v588 = vor.u32 %v586, %v587
    %v589 = vshll.u32 2131351028, %v580
    %v590 = vshrl.u32 2102212464, %v581
    %v591 = vor.u32 %v589, %v590
    %v592 = vshll.u32 2102212464, %v580
    %v593 = vshrl.u32 920167782, %v581
    %v594 = vor.u32 %v592, %v593
    %v595 = vshll.u32 920167782, %v580
    %v596 = vshrl.u32 1326507024, %v581
    %v597 = vor.u32 %v595, %v596
    %vm598 = vcmp.lt.s32.totalorder %v579, 1
    %vm599 = vcmp.lt.s32.totalorder %v579, 2
    %vm600 = vcmp.lt.s32.totalorder %v579, 3
    %vm601 = vcmp.lt.s32.totalorder %v579, 4
    %v602 = vsel %vm598, %v582, %v585
    %v603 = vsel %vm601, %v591, 2102212464
    %v604 = vsel %vm600, %v588, %v603
    %v605 = vsel %vm599, %v602, %v604
    %v606 = vsel %vm598, %v585, %v588
    %v607 = vsel %vm601, %v594, 920167782
    %v608 = vsel %vm600, %v591, %v607
    %v609 = vsel %vm599, %v606, %v608
    %v610 = vsel %vm598, %v588, %v591
    %v611 = vsel %vm601, %v597, 1326507024
    %v612 = vsel %vm600, %v594, %v611
    %v613 = vsel %vm599, %v610, %v612
    %v614 = vshll.u32 %v574, 8
    %v615 = vmul.u32.u64.compose %v614, %v613
    %v616 = vextract.low.u32 %v615
    %v617 = vextract.high.u32 %v615
    %v618 = vmul.u32.u64.compose %v614, %v609
    %v619 = vextract.low.u32 %v618
    %v620 = vextract.high.u32 %v618
    %v621 = vmul.u32 %v614, %v605
    %v622 = vadd.s32 %v617, %v619
    %vm623 = vc.u32 %v617, %v619
    %v624 = vadd.s32 %v620, 1
    %v625 = vsel %vm623, %v624, %v620
    %v626 = vadd.s32 %v621, %v625
    %v627 = vadd.s32 %v626, 536870912
    %v628 = vshrl.u32 %v627, 30
    %v629 = vshll.u32 %v628, 30
    %v630 = vsub.s32 %v626, %v629
    %vm631 = vcmp.lt.s32.totalorder %v630, 0
    %v632 = vsub.s32 0, %v630
    %v633 = vsel %vm631, %v632, %v630
    %v634 = vclz %v633
    %v635 = vsub.s32 %v634, 2
    %vm636 = vcmp.gt.s32.totalorder 0, %v635
    %v637 = vsel %vm636, 0, %v635
    %v638 = vsub.s32 32, %v637
    %v639 = vshll.u32 %v630, %v637
    %v640 = vshrl.u32 %v622, %v638
    %v641 = vor.u32 %v639, %v640
    %v642 = vsub.s32 4294967266, %v637
    %v643 = vadd.s32 %v642, 127
    %v644 = vshll.u32 %v643, 23
    %v645 = vor.u32 4788187, %v644
    %v646 = vand.u32 2147483647, %v645
    %v648 = vcvt.s32.f32 %v641
    %v649 = vmul.f32 %v648, %v646
    %v650 = vxor.u32 %v649, 2147483648
    %v651 = vsel %vm568, %v650, %v649
    %v652 = vsub.s32 4, %v628
    %v653 = vsel %vm568, %v652, %v628
    %v654 = vsel %vm567, %v461, %v651
    %v655 = vsel %vm567, 0, %v653
    %v656 = vcosq.f32.pop %v654
    %v657 = vsinq.f32.pop %v654
    %vm658 = vweird.f32 %v461
    %v659 = vand.u32 %v655, 3
    %vm660 = vcmp.lt.s32.totalorder %v659, 2
    %vm661 = vcmp.eq.s32.totalorder %v659, 0
    %v662 = vxor.u32 %v657, 2147483648
    %v663 = vsel %vm661, %v656, %v662
    %vm664 = vcmp.eq.s32.totalorder %v659, 2
    %v665 = vxor.u32 %v656, 2147483648
    %v666 = vsel %vm664, %v665, %v657
    %v667 = vsel %vm660, %v663, %v666
    %v668 = vsel %vm658, nan, %v667
    %669 = vset.pattern.permute.xlu0 3
    %670 = vperm.xlu0 %669, %v25
    %v671 = vpop.permute.xlu0 %670
    %v673 = vmul.f32 %v671, %v35
    %v674 = vand.u32 2147483647, %v673
    %vm675 = vcmp.le.f32.partialorder %v674, 0.7853982
    %vm676 = vcmp.lt.s32.totalorder %v673, 0
    %v677 = vand.u32 %v673, 2139095040
    %v678 = vshrl.u32 %v677, 23
    %v679 = vsub.s32 %v678, 127
    %v680 = vand.u32 2147483647, %v673
    %v681 = vand.u32 %v680, 8388607
    %v682 = vor.u32 %v681, 8388608
    %v683 = vsub.s32 0, %v682
    %v684 = vadd.s32 %v679, 1
    %vm685 = vcmp.gt.s32.totalorder %v684, 0
    %v686 = vsel %vm685, %v684, 0
    %v687 = vshrl.u32 %v686, 5
    %v688 = vand.u32 %v686, 31
    %v689 = vsub.s32 32, %v688
    %v690 = vshrl.u32 683565275, %v689
    %v691 = vshll.u32 683565275, %v688
    %v692 = vshrl.u32 2475754826, %v689
    %v693 = vor.u32 %v691, %v692
    %v694 = vshll.u32 2475754826, %v688
    %v695 = vshrl.u32 2131351028, %v689
    %v696 = vor.u32 %v694, %v695
    %v697 = vshll.u32 2131351028, %v688
    %v698 = vshrl.u32 2102212464, %v689
    %v699 = vor.u32 %v697, %v698
    %v700 = vshll.u32 2102212464, %v688
    %v701 = vshrl.u32 920167782, %v689
    %v702 = vor.u32 %v700, %v701
    %v703 = vshll.u32 920167782, %v688
    %v704 = vshrl.u32 1326507024, %v689
    %v705 = vor.u32 %v703, %v704
    %vm706 = vcmp.lt.s32.totalorder %v687, 1
    %vm707 = vcmp.lt.s32.totalorder %v687, 2
    %vm708 = vcmp.lt.s32.totalorder %v687, 3
    %vm709 = vcmp.lt.s32.totalorder %v687, 4
    %v710 = vsel %vm706, %v690, %v693
    %v711 = vsel %vm709, %v699, 2102212464
    %v712 = vsel %vm708, %v696, %v711
    %v713 = vsel %vm707, %v710, %v712
    %v714 = vsel %vm706, %v693, %v696
    %v715 = vsel %vm709, %v702, 920167782
    %v716 = vsel %vm708, %v699, %v715
    %v717 = vsel %vm707, %v714, %v716
    %v718 = vsel %vm706, %v696, %v699
    %v719 = vsel %vm709, %v705, 1326507024
    %v720 = vsel %vm708, %v702, %v719
    %v721 = vsel %vm707, %v718, %v720
    %v722 = vshll.u32 %v682, 8
    %v723 = vmul.u32.u64.compose %v722, %v721
    %v724 = vextract.low.u32 %v723
    %v725 = vextract.high.u32 %v723
    %v726 = vmul.u32.u64.compose %v722, %v717
    %v727 = vextract.low.u32 %v726
    %v728 = vextract.high.u32 %v726
    %v729 = vmul.u32 %v722, %v713
    %v730 = vadd.s32 %v725, %v727
    %vm731 = vc.u32 %v725, %v727
    %v732 = vadd.s32 %v728, 1
    %v733 = vsel %vm731, %v732, %v728
    %v734 = vadd.s32 %v729, %v733
    %v735 = vadd.s32 %v734, 536870912
    %v736 = vshrl.u32 %v735, 30
    %v737 = vshll.u32 %v736, 30
    %v738 = vsub.s32 %v734, %v737
    %vm739 = vcmp.lt.s32.totalorder %v738, 0
    %v740 = vsub.s32 0, %v738
    %v741 = vsel %vm739, %v740, %v738
    %v742 = vclz %v741
    %v743 = vsub.s32 %v742, 2
    %vm744 = vcmp.gt.s32.totalorder 0, %v743
    %v745 = vsel %vm744, 0, %v743
    %v746 = vsub.s32 32, %v745
    %v747 = vshll.u32 %v738, %v745
    %v748 = vshrl.u32 %v730, %v746
    %v749 = vor.u32 %v747, %v748
    %v750 = vsub.s32 4294967266, %v745
    %v751 = vadd.s32 %v750, 127
    %v752 = vshll.u32 %v751, 23
    %v753 = vor.u32 4788187, %v752
    %v754 = vand.u32 2147483647, %v753
    %v756 = vcvt.s32.f32 %v749
    %v757 = vmul.f32 %v756, %v754
    %v758 = vxor.u32 %v757, 2147483648
    %v759 = vsel %vm676, %v758, %v757
    %v760 = vsub.s32 4, %v736
    %v761 = vsel %vm676, %v760, %v736
    %v762 = vsel %vm675, %v673, %v759
    %v763 = vsel %vm675, 0, %v761
    %v764 = vcosq.f32.pop %v762
    %v765 = vsinq.f32.pop %v762
    %vm766 = vweird.f32 %v673
    %v767 = vadd.s32 %v763, 3
    %v768 = vand.u32 %v767, 3
    %vm769 = vcmp.lt.s32.totalorder %v768, 2
    %vm770 = vcmp.eq.s32.totalorder %v768, 0
    %v771 = vxor.u32 %v765, 2147483648
    %v772 = vsel %vm770, %v764, %v771
    %vm773 = vcmp.eq.s32.totalorder %v768, 2
    %v774 = vxor.u32 %v764, 2147483648
    %v775 = vsel %vm773, %v774, %v765
    %v776 = vsel %vm769, %v772, %v775
    %v777 = vsel %vm766, nan, %v776
    %v778 = vand.u32 2147483647, %v673
    %vm779 = vcmp.le.f32.partialorder %v778, 0.7853982
    %vm780 = vcmp.lt.s32.totalorder %v673, 0
    %v781 = vand.u32 %v673, 2139095040
    %v782 = vshrl.u32 %v781, 23
    %v783 = vsub.s32 %v782, 127
    %v784 = vand.u32 2147483647, %v673
    %v785 = vand.u32 %v784, 8388607
    %v786 = vor.u32 %v785, 8388608
    %v787 = vsub.s32 0, %v786
    %v788 = vadd.s32 %v783, 1
    %vm789 = vcmp.gt.s32.totalorder %v788, 0
    %v790 = vsel %vm789, %v788, 0
    %v791 = vshrl.u32 %v790, 5
    %v792 = vand.u32 %v790, 31
    %v793 = vsub.s32 32, %v792
    %v794 = vshrl.u32 683565275, %v793
    %v795 = vshll.u32 683565275, %v792
    %v796 = vshrl.u32 2475754826, %v793
    %v797 = vor.u32 %v795, %v796
    %v798 = vshll.u32 2475754826, %v792
    %v799 = vshrl.u32 2131351028, %v793
    %v800 = vor.u32 %v798, %v799
    %v801 = vshll.u32 2131351028, %v792
    %v802 = vshrl.u32 2102212464, %v793
    %v803 = vor.u32 %v801, %v802
    %v804 = vshll.u32 2102212464, %v792
    %v805 = vshrl.u32 920167782, %v793
    %v806 = vor.u32 %v804, %v805
    %v807 = vshll.u32 920167782, %v792
    %v808 = vshrl.u32 1326507024, %v793
    %v809 = vor.u32 %v807, %v808
    %vm810 = vcmp.lt.s32.totalorder %v791, 1
    %vm811 = vcmp.lt.s32.totalorder %v791, 2
    %vm812 = vcmp.lt.s32.totalorder %v791, 3
    %vm813 = vcmp.lt.s32.totalorder %v791, 4
    %v814 = vsel %vm810, %v794, %v797
    %v815 = vsel %vm813, %v803, 2102212464
    %v816 = vsel %vm812, %v800, %v815
    %v817 = vsel %vm811, %v814, %v816
    %v818 = vsel %vm810, %v797, %v800
    %v819 = vsel %vm813, %v806, 920167782
    %v820 = vsel %vm812, %v803, %v819
    %v821 = vsel %vm811, %v818, %v820
    %v822 = vsel %vm810, %v800, %v803
    %v823 = vsel %vm813, %v809, 1326507024
    %v824 = vsel %vm812, %v806, %v823
    %v825 = vsel %vm811, %v822, %v824
    %v826 = vshll.u32 %v786, 8
    %v827 = vmul.u32.u64.compose %v826, %v825
    %v828 = vextract.low.u32 %v827
    %v829 = vextract.high.u32 %v827
    %v830 = vmul.u32.u64.compose %v826, %v821
    %v831 = vextract.low.u32 %v830
    %v832 = vextract.high.u32 %v830
    %v833 = vmul.u32 %v826, %v817
    %v834 = vadd.s32 %v829, %v831
    %vm835 = vc.u32 %v829, %v831
    %v836 = vadd.s32 %v832, 1
    %v837 = vsel %vm835, %v836, %v832
    %v838 = vadd.s32 %v833, %v837
    %v839 = vadd.s32 %v838, 536870912
    %v840 = vshrl.u32 %v839, 30
    %v841 = vshll.u32 %v840, 30
    %v842 = vsub.s32 %v838, %v841
    %vm843 = vcmp.lt.s32.totalorder %v842, 0
    %v844 = vsub.s32 0, %v842
    %v845 = vsel %vm843, %v844, %v842
    %v846 = vclz %v845
    %v847 = vsub.s32 %v846, 2
    %vm848 = vcmp.gt.s32.totalorder 0, %v847
    %v849 = vsel %vm848, 0, %v847
    %v850 = vsub.s32 32, %v849
    %v851 = vshll.u32 %v842, %v849
    %v852 = vshrl.u32 %v834, %v850
    %v853 = vor.u32 %v851, %v852
    %v854 = vsub.s32 4294967266, %v849
    %v855 = vadd.s32 %v854, 127
    %v856 = vshll.u32 %v855, 23
    %v857 = vor.u32 4788187, %v856
    %v858 = vand.u32 2147483647, %v857
    %v860 = vcvt.s32.f32 %v853
    %v861 = vmul.f32 %v860, %v858
    %v862 = vxor.u32 %v861, 2147483648
    %v863 = vsel %vm780, %v862, %v861
    %v864 = vsub.s32 4, %v840
    %v865 = vsel %vm780, %v864, %v840
    %v866 = vsel %vm779, %v673, %v863
    %v867 = vsel %vm779, 0, %v865
    %v868 = vcosq.f32.pop %v866
    %v869 = vsinq.f32.pop %v866
    %vm870 = vweird.f32 %v673
    %v871 = vand.u32 %v867, 3
    %vm872 = vcmp.lt.s32.totalorder %v871, 2
    %vm873 = vcmp.eq.s32.totalorder %v871, 0
    %v874 = vxor.u32 %v869, 2147483648
    %v875 = vsel %vm873, %v868, %v874
    %vm876 = vcmp.eq.s32.totalorder %v871, 2
    %v877 = vxor.u32 %v868, 2147483648
    %v878 = vsel %vm876, %v877, %v869
    %v879 = vsel %vm872, %v875, %v878
    %v880 = vsel %vm870, nan, %v879
    %882 = vrot.lane.b32.xlu0 %v244, 16
    %v883 = vpop.permute.xlu0 %882
    %886 = vrot.lane.b32.xlu0 %v353, 32
    %v887 = vpop.permute.xlu0 %886
    %890 = vrot.lane.b32.xlu0 %v456, 48
    %v891 = vpop.permute.xlu0 %890
    %894 = vrot.lane.b32.xlu0 %v565, 64
    %v895 = vpop.permute.xlu0 %894
    %898 = vrot.lane.b32.xlu0 %v668, 80
    %v899 = vpop.permute.xlu0 %898
    %902 = vrot.lane.b32.xlu0 %v777, 96
    %v903 = vpop.permute.xlu0 %902
    %906 = vrot.lane.b32.xlu0 %v880, 112
    %v907 = vpop.permute.xlu0 %906
    %vm909 = vcmask 130048
    %v910 = vsel %vm909, %v141, %v883
    %vm911 = vcmask 261120
    %v912 = vsel %vm911, %v910, %v887
    %vm913 = vcmask 392192
    %v914 = vsel %vm913, %v912, %v891
    %vm915 = vcmask 523264
    %v916 = vsel %vm915, %v914, %v895
    %vm917 = vcmask 654336
    %v918 = vsel %vm917, %v916, %v899
    %vm919 = vcmask 785408
    %v920 = vsel %vm919, %v918, %v903
    %vm921 = vcmask 916480
    %v922 = vsel %vm921, %v920, %v907
    %923 = vst [vmem:[#allocation5] sm:$0x3] %v922
    // Predicated region
    $region14: #{tpu_custom_call.1} parent=1 // pred_check
      _
    $region15: #{tpu_custom_call.1} parent=1 // pred_check_branch
      %925 = sbr.rel (0) target = $region17
    $region16: #{tpu_custom_call.1} parent=1 // pred_region
      %s927 = ssub.s32 32, 32
      %928 = vsyncadd [#allocation4], %s927
      %s930 = sshll.u32 [#allocation5], 4
      %s931 = int_to_ptr.vmem [resolvable:$true] %s930
      %933 = dma.vmem_to_hbm [thread:$0]  %s931, 32, %s2, [#allocation4]
    $region17: #{tpu_custom_call.1} parent=1 // pred_fallthru
      _
    // Predicated region
    $region18: #{tpu_custom_call.1} parent=1 // pred_check
      _
    $region19: #{tpu_custom_call.1} parent=1 // pred_check_branch
      %935 = sbr.rel (0) target = $region21
    $region20: #{tpu_custom_call.1} parent=1 // pred_region
      %936 = dma.done [#allocation4], 32
    $region21: #{tpu_custom_call.1} parent=1 // pred_fallthru
      _
    %937 = vsyncpa [#allocation3], 1
    %938 = vsyncpa [#allocation4], 1

</llo_original>
